<compile_context>
chip_gen: v7x
topology: tpu7x:2x2x1
jax: 0.10.0
libtpu: 0.0.40
codegen_flags: <defaults>
</compile_context>

<pallas_src>
import functools

import jax
import jax.numpy as jnp
from jax import lax
from jax.experimental import pallas as pl
from jax.experimental.pallas import tpu as pltpu


def _contrastive_loss_kernel(x_ref, o_ref, m_sc, l_sc, x0_sc, *,
                             inv_temp: float, c_total: int, tile_c: int,
                             mask_cols: bool):
    """One (TILE_N, TILE_C) block; online logsumexp over the column grid axis."""
    k = pl.program_id(1)
    nk = pl.num_programs(1)

    @pl.when(k == 0)
    def _init():
        m_sc[...] = jnp.full(m_sc.shape, -jnp.inf, dtype=m_sc.dtype)
        l_sc[...] = jnp.zeros(l_sc.shape, dtype=l_sc.dtype)
        # Target class is 0 for every row -> its logit is column 0 of block 0.
        x0_sc[...] = x_ref[:, 0:1].astype(jnp.float32) * inv_temp

    x = x_ref[...].astype(jnp.float32) * inv_temp            # (TILE_N, TILE_C)

    if mask_cols:
        # Last column block is partial: mask padded lanes with -inf so they do
        # not contribute to the max or the exp-sum.
        col = lax.broadcasted_iota(jnp.int32, x.shape, 1) + k * tile_c
        x = jnp.where(col < c_total, x, -jnp.inf)

    m_prev = m_sc[...]                                        # (TILE_N, 1)
    m_new = jnp.maximum(m_prev, jnp.max(x, axis=-1, keepdims=True))
    p_sum = jnp.sum(jnp.exp(x - m_new), axis=-1, keepdims=True)
    l_sc[...] = jnp.exp(m_prev - m_new) * l_sc[...] + p_sum
    m_sc[...] = m_new

    @pl.when(k == nk - 1)
    def _finalize():
        lse = jnp.log(l_sc[...]) + m_sc[...]                  # (TILE_N, 1)
        o_ref[...] = lse - x0_sc[...]                         # per-row loss


def _choose_tiles(n: int, c: int):
    # Rows: biggest tile <= 512 (multiple-of-8 rule satisfied since 512 % 8 == 0;
    # tile_n == n is always legal when n <= 512).
    tile_n = n if n <= 512 else 512
    # Columns: keep the whole row if it is small, otherwise tile in
    # 2048-lane (multiple of 128) chunks and mask the remainder.
    tile_c = c if c <= 4096 else 2048
    return tile_n, tile_c


def contrastive_loss(inputs: jax.Array,
                     temperature: float = 0.1,
                     reduction: str = "mean") -> jax.Array:
    """Pallas equivalent of ContrastiveLoss.forward for (N, C) inputs."""
    n, c = inputs.shape
    tile_n, tile_c = _choose_tiles(n, c)
    mask_cols = (c % tile_c) != 0
    grid = (pl.cdiv(n, tile_n), pl.cdiv(c, tile_c))

    kernel = functools.partial(
        _contrastive_loss_kernel,
        inv_temp=1.0 / temperature,
        c_total=c,
        tile_c=tile_c,
        mask_cols=mask_cols,
    )

    itemsize = jnp.dtype(inputs.dtype).itemsize
    cost = pl.CostEstimate(
        flops=3 * n * c,                 # scale + sub + sum (rough)
        transcendentals=n * c,           # exp per element
        bytes_accessed=n * c * itemsize + n * 4,
    )

    per_row = pl.pallas_call(
        kernel,
        out_shape=jax.ShapeDtypeStruct((n, 1), jnp.float32),
        grid_spec=pltpu.PrefetchScalarGridSpec(
            num_scalar_prefetch=0,
            grid=grid,
            in_specs=[pl.BlockSpec((tile_n, tile_c), lambda i, k: (i, k))],
            out_specs=pl.BlockSpec((tile_n, 1), lambda i, k: (i, 0)),
            scratch_shapes=[
                pltpu.VMEM((tile_n, 1), jnp.float32),   # running max
                pltpu.VMEM((tile_n, 1), jnp.float32),   # running exp-sum
                pltpu.VMEM((tile_n, 1), jnp.float32),   # target logit x[:,0]/T
            ],
        ),
        compiler_params=pltpu.CompilerParams(
            dimension_semantics=("parallel", "arbitrary")),
        cost_estimate=cost,
    )(inputs)

    per_row = per_row[:, 0]                              # (N,)
    if reduction == "mean":
        return jnp.mean(per_row)
    elif reduction == "sum":
        return jnp.sum(per_row)
    elif reduction == "none":
        return per_row
    else:
        raise ValueError(f"Unsupported reduction: {reduction!r}")


def _reference(inputs, temperature=0.1, reduction="mean"):
    # Pure-JAX reference: CrossEntropyLoss with targets = 0.
    x = inputs.astype(jnp.float32) / temperature
    logp = jax.nn.log_softmax(x, axis=-1)
    per_row = -logp[:, 0]
    if reduction == "mean":
        return jnp.mean(per_row)
    if reduction == "sum":
        return jnp.sum(per_row)
    return per_row


if __name__ == "__main__":
    key = jax.random.PRNGKey(0)

    # Small case matching the module contract (N x C).
    N, C = 8, 32
    x_small = jax.random.normal(key, (N, C), dtype=jnp.float32)

    loss = jax.block_until_ready(contrastive_loss(x_small, 0.1, "mean"))
    ref = _reference(x_small, 0.1, "mean")
    assert jnp.allclose(loss, ref, rtol=1e-5, atol=1e-4), (loss, ref)

    loss_sum = jax.block_until_ready(contrastive_loss(x_small, 0.1, "sum"))
    ref_sum = _reference(x_small, 0.1, "sum")
    assert jnp.allclose(loss_sum, ref_sum, rtol=1e-5, atol=1e-4), (loss_sum, ref_sum)

    loss_none = jax.block_until_ready(contrastive_loss(x_small, 0.1, "none"))
    ref_none = _reference(x_small, 0.1, "none")
    assert loss_none.shape == (N,)
    assert jnp.allclose(loss_none, ref_none, rtol=1e-5, atol=1e-4)

    # Moderate case that exercises column tiling + online logsumexp + masking
    # (C not a multiple of the 2048 column tile).
    key2 = jax.random.PRNGKey(0)
    N2, C2 = 16, 4224
    x_big = jax.random.normal(key2, (N2, C2), dtype=jnp.float32)
    loss2 = jax.block_until_ready(contrastive_loss(x_big, 0.1, "mean"))
    ref2 = _reference(x_big, 0.1, "mean")
    assert jnp.allclose(loss2, ref2, rtol=1e-5, atol=1e-4), (loss2, ref2)

    print("KERNEL_OK")
</pallas_src>

<mosaic_0001>
module attributes {stable_mosaic.version = 11 : i64} {
  func.func @_contrastive_loss_kernel(%arg0: i32, %arg1: i32, %arg2: memref<8x32xf32, #tpu.memory_space<vmem>>, %arg3: memref<8x1xf32, #tpu.memory_space<vmem>>, %arg4: memref<8x1xf32, #tpu.memory_space<vmem>>, %arg5: memref<8x1xf32, #tpu.memory_space<vmem>>, %arg6: memref<8x1xf32, #tpu.memory_space<vmem>>) attributes {dimension_semantics = [#tpu.dimension_semantics<parallel>, #tpu.dimension_semantics<arbitrary>], iteration_bounds = array<i64: 1, 1>, scalar_prefetch = 0 : i64, scratch_operands = 3 : i64, tpu.core_type = #tpu.core_type<tc>, window_params = [{transform_indices = @transform_0, window_bounds = array<i64: 8, 32>}, {transform_indices = @transform_1, window_bounds = array<i64: 8, 1>}]} {
    %c0_i32 = arith.constant 0 : i32
    %0 = arith.cmpi eq, %arg1, %c0_i32 : i32
    %1 = arith.extui %0 : i1 to i32
    %c0_i32_0 = arith.constant 0 : i32
    %2 = arith.cmpi ne, %1, %c0_i32_0 : i32
    scf.if %2 {
      %cst_14 = arith.constant 0xFF800000 : f32
      %25 = vector.broadcast %cst_14 : f32 to vector<8x1xf32>
      %c0_15 = arith.constant 0 : index
      %c0_16 = arith.constant 0 : index
      %26 = vector.load %arg4[%c0_15, %c0_16] : memref<8x1xf32, #tpu.memory_space<vmem>>, vector<8x1xf32>
      tpu.vector_store %arg4[%c0_15, %c0_16], %25 {strides = array<i32>} : memref<8x1xf32, #tpu.memory_space<vmem>>, vector<8x1xf32>,
      %cst_17 = arith.constant 0.000000e+00 : f32
      %27 = vector.broadcast %cst_17 : f32 to vector<8x1xf32>
      %c0_18 = arith.constant 0 : index
      %c0_19 = arith.constant 0 : index
      %28 = vector.load %arg5[%c0_18, %c0_19] : memref<8x1xf32, #tpu.memory_space<vmem>>, vector<8x1xf32>
      tpu.vector_store %arg5[%c0_18, %c0_19], %27 {strides = array<i32>} : memref<8x1xf32, #tpu.memory_space<vmem>>, vector<8x1xf32>,
      %c0_20 = arith.constant 0 : index
      %c0_21 = arith.constant 0 : index
      %29 = vector.load %arg2[%c0_20, %c0_21] : memref<8x32xf32, #tpu.memory_space<vmem>>, vector<8x1xf32>
      %cst_22 = arith.constant 1.000000e+01 : f32
      %30 = vector.broadcast %cst_22 : f32 to vector<8x1xf32>
      %31 = arith.mulf %29, %30 : vector<8x1xf32>
      %c0_23 = arith.constant 0 : index
      %c0_24 = arith.constant 0 : index
      %32 = vector.load %arg6[%c0_23, %c0_24] : memref<8x1xf32, #tpu.memory_space<vmem>>, vector<8x1xf32>
      tpu.vector_store %arg6[%c0_23, %c0_24], %31 {strides = array<i32>} : memref<8x1xf32, #tpu.memory_space<vmem>>, vector<8x1xf32>,
    } else {
    }
    %c0 = arith.constant 0 : index
    %c0_1 = arith.constant 0 : index
    %3 = vector.load %arg2[%c0, %c0_1] : memref<8x32xf32, #tpu.memory_space<vmem>>, vector<8x32xf32>
    %cst = arith.constant 1.000000e+01 : f32
    %4 = vector.broadcast %cst : f32 to vector<8x32xf32>
    %5 = arith.mulf %3, %4 : vector<8x32xf32>
    %c0_2 = arith.constant 0 : index
    %c0_3 = arith.constant 0 : index
    %6 = vector.load %arg4[%c0_2, %c0_3] : memref<8x1xf32, #tpu.memory_space<vmem>>, vector<8x1xf32>
    %cst_4 = arith.constant dense<0xFF800000> : vector<8xf32>
    %7 = vector.multi_reduction <maximumf>, %5, %cst_4 [1] : vector<8x32xf32> to vector<8xf32>
    %8 = vector.shape_cast %7 : vector<8xf32> to vector<8x1xf32>
    %9 = arith.maximumf %6, %8 : vector<8x1xf32>
    %10 = vector.broadcast %9 : vector<8x1xf32> to vector<8x32xf32>
    %11 = arith.subf %5, %10 : vector<8x32xf32>
    %12 = math.exp %11 : vector<8x32xf32>
    %cst_5 = arith.constant dense<0.000000e+00> : vector<8xf32>
    %13 = vector.multi_reduction <add>, %12, %cst_5 [1] : vector<8x32xf32> to vector<8xf32>
    %14 = vector.shape_cast %13 : vector<8xf32> to vector<8x1xf32>
    %15 = arith.subf %6, %9 : vector<8x1xf32>
    %16 = math.exp %15 : vector<8x1xf32>
    %c0_6 = arith.constant 0 : index
    %c0_7 = arith.constant 0 : index
    %17 = vector.load %arg5[%c0_6, %c0_7] : memref<8x1xf32, #tpu.memory_space<vmem>>, vector<8x1xf32>
    %18 = arith.mulf %16, %17 : vector<8x1xf32>
    %19 = arith.addf %18, %14 : vector<8x1xf32>
    %c0_8 = arith.constant 0 : index
    %c0_9 = arith.constant 0 : index
    %20 = vector.load %arg5[%c0_8, %c0_9] : memref<8x1xf32, #tpu.memory_space<vmem>>, vector<8x1xf32>
    tpu.vector_store %arg5[%c0_8, %c0_9], %19 {strides = array<i32>} : memref<8x1xf32, #tpu.memory_space<vmem>>, vector<8x1xf32>,
    %c0_10 = arith.constant 0 : index
    %c0_11 = arith.constant 0 : index
    %21 = vector.load %arg4[%c0_10, %c0_11] : memref<8x1xf32, #tpu.memory_space<vmem>>, vector<8x1xf32>
    tpu.vector_store %arg4[%c0_10, %c0_11], %9 {strides = array<i32>} : memref<8x1xf32, #tpu.memory_space<vmem>>, vector<8x1xf32>,
    %c0_i32_12 = arith.constant 0 : i32
    %22 = arith.cmpi eq, %arg1, %c0_i32_12 : i32
    %23 = arith.extui %22 : i1 to i32
    %c0_i32_13 = arith.constant 0 : i32
    %24 = arith.cmpi ne, %23, %c0_i32_13 : i32
    scf.if %24 {
      %c0_14 = arith.constant 0 : index
      %c0_15 = arith.constant 0 : index
      %25 = vector.load %arg5[%c0_14, %c0_15] : memref<8x1xf32, #tpu.memory_space<vmem>>, vector<8x1xf32>
      %26 = math.log %25 : vector<8x1xf32>
      %c0_16 = arith.constant 0 : index
      %c0_17 = arith.constant 0 : index
      %27 = vector.load %arg4[%c0_16, %c0_17] : memref<8x1xf32, #tpu.memory_space<vmem>>, vector<8x1xf32>
      %28 = arith.addf %26, %27 : vector<8x1xf32>
      %c0_18 = arith.constant 0 : index
      %c0_19 = arith.constant 0 : index
      %29 = vector.load %arg6[%c0_18, %c0_19] : memref<8x1xf32, #tpu.memory_space<vmem>>, vector<8x1xf32>
      %30 = arith.subf %28, %29 : vector<8x1xf32>
      %c0_20 = arith.constant 0 : index
      %c0_21 = arith.constant 0 : index
      %31 = vector.load %arg3[%c0_20, %c0_21] : memref<8x1xf32, #tpu.memory_space<vmem>>, vector<8x1xf32>
      tpu.vector_store %arg3[%c0_20, %c0_21], %30 {strides = array<i32>} : memref<8x1xf32, #tpu.memory_space<vmem>>, vector<8x1xf32>,
    } else {
    }
    return
  }
  func.func @transform_0(%arg0: i32, %arg1: i32) -> (i32, i32) {
    %c0_i32 = arith.constant 0 : i32
    return %arg0, %arg1 : i32, i32
  }
  func.func @transform_1(%arg0: i32, %arg1: i32) -> (i32, i32) {
    %c0_i32 = arith.constant 0 : i32
    %c0_i32_0 = arith.constant 0 : i32
    return %arg0, %c0_i32 : i32, i32
  }
}

</mosaic_0001>

<llo_original>
// kernel: tpu_custom_call.1
$region0: #{tpu_custom_call.1}
  #allocation0 [shape = 'u32[]', space=smem, size = 0x4, offset = 0x4, fixed_abs, tag = 'smem constant byte address 0x4 - core index']
  #allocation1 [shape = 'u32[144,128]{1,0:T(1,128)}', space=vmem, size = 0x12000, scoped, tag = 'internal scratch']
  #allocation2 [shape = 'f32[8,1]{1,0:T(8,128)}', space=vmem, size = 0x1000, scoped, tag = 'scratch operand']
  #allocation3 [shape = 'f32[8,1]{1,0:T(8,128)}', space=vmem, size = 0x1000, scoped, tag = 'scratch operand']
  #allocation4 [shape = 'f32[8,1]{1,0:T(8,128)}', space=vmem, size = 0x1000, scoped, tag = 'scratch operand']
  %s0 = inlined_call_operand.hbm [shape: f32[8,32], index: 0, kind: input, shape index: {}]
  %s1 = inlined_call_operand.vmem [shape: f32[8,1], index: 1, kind: output, shape index: {}]
  %s2 = sld [smem:[#allocation0]]
  $region26: #{tpu_custom_call.1} parent=0
    _
  %s4 = ssub.s32 1, %s2
  %s5 = scalar_select 0, %s4, %s2
  $region1: #{tpu_custom_call.1} parent=0
    #allocation5 [shape = 'u8[4096]{0}', space=vmem, size = 0x1000, scoped, tag = 'input window, operand 0, single buffered']
    #allocation6 [shape = 's32[1]{0}', space=sflag, size = 0x4, scoped, tag = 'scoped memory for tpu_custom_call.1']
    %6 = vsyncpa [#allocation6], 0
    // Predicated region
    $region2: #{tpu_custom_call.1} parent=1 // pred_check
      _
    $region3: #{tpu_custom_call.1} parent=1 // pred_check_branch
      %8 = sbr.rel (0) target = $region5
    $region4: #{tpu_custom_call.1} parent=1 // pred_region
      %s10 = ssub.s32 128, 128
      %11 = vsyncadd [#allocation6], %s10
      %s13 = sshll.u32 [#allocation5], 4
      %s14 = int_to_ptr.vmem [resolvable:$true] %s13
      %16 = dma.hbm_to_vmem [thread:$0]  %s0, 128, %s14, [#allocation6]
    $region5: #{tpu_custom_call.1} parent=1 // pred_fallthru
      _
    // Predicated region
    $region6: #{tpu_custom_call.1} parent=1 // pred_check
      _
    $region7: #{tpu_custom_call.1} parent=1 // pred_check_branch
      %18 = sbr.rel (0) target = $region9
    $region8: #{tpu_custom_call.1} parent=1 // pred_region
      %19 = dma.done [#allocation6], 128
    $region9: #{tpu_custom_call.1} parent=1 // pred_fallthru
      _
    %p20 = scmp.eq.s32.totalorder 0, 0
    // Predicated region
    $region10: #{tpu_custom_call.1} parent=1 // pred_check
      %p21 = pneg %p20
    $region11: #{tpu_custom_call.1} parent=1 // pred_check_branch
      %23 = sbr.rel (%p21) target = $region13
    $region12: #{tpu_custom_call.1} parent=1 // pred_region
      %vm24 = vcmask 7168
      %25 = vst.msk [vmem:[#allocation2] sm:$0xff] %vm24, -inf
      %26 = vst.msk [vmem:[#allocation3] sm:$0xff] %vm24, 0.0
      %v27 = vld [vmem:[#allocation5] sm:$0xff]
      %v28 = vmul.f32 %v27, 10.0
      %29 = vst.msk [vmem:[#allocation4] sm:$0xff] %vm24, %v28
    $region13: #{tpu_custom_call.1} parent=1 // pred_fallthru
      _
    %v30 = vld [vmem:[#allocation5] sm:$0xff]
    %v31 = vmul.f32 %v30, 10.0
    %v32 = vld [vmem:[#allocation2] sm:$0xff]
    %vm33 = vcmask 261120
    %v34 = vsel %vm33, %v31, -inf
    %35 = vmax.xlane.f32.xlu0 %v34
    %v36 = vpop.xlane.xlu0 %35
    %v37 = vmax.f32 %v32, %v36
    %39 = vset.pattern.permute.xlu0 0
    %40 = vperm.xlu0 %39, %v37
    %v41 = vpop.permute.xlu0 %40
    %v43 = vsub.f32 %v31, %v41
    %v44 = vmul.f32 %v43, 1.442695
    %v45 = vpow.pop %v44
    %v46 = vsel %vm33, %v45, 0.0
    %47 = vadd.xlane.f32.xlu0 %v46
    %v48 = vpop.xlane.xlu0 %47
    %v49 = vsub.f32 %v32, %v37
    %v50 = vmul.f32 %v49, 1.442695
    %v51 = vpow.pop %v50
    %v52 = vld [vmem:[#allocation3] sm:$0xff]
    %v53 = vmul.f32 %v51, %v52
    %v54 = vadd.f32 %v53, %v48
    %vm55 = vcmask 7168
    %56 = vst.msk [vmem:[#allocation3] sm:$0xff] %vm55, %v54
    %57 = vst.msk [vmem:[#allocation2] sm:$0xff] %vm55, %v37
    // Predicated region
    $region14: #{tpu_custom_call.1} parent=1 // pred_check
      %p58 = pneg %p20
    $region15: #{tpu_custom_call.1} parent=1 // pred_check_branch
      %60 = sbr.rel (%p58) target = $region17
    $region16: #{tpu_custom_call.1} parent=1 // pred_region
      %v61 = vld [vmem:[#allocation3] sm:$0xff]
      %v62 = vlog2.pop %v61
      %v63 = vmul.f32 %v62, 0.6931472
      %v64 = vld [vmem:[#allocation2] sm:$0xff]
      %v65 = vadd.f32 %v63, %v64
      %v66 = vld [vmem:[#allocation4] sm:$0xff]
      %v67 = vsub.f32 %v65, %v66
      %68 = vst.msk [vmem:[%s1] sm:$0xff] %vm55, %v67
    $region17: #{tpu_custom_call.1} parent=1 // pred_fallthru
      _
    // Predicated region
    $region18: #{tpu_custom_call.1} parent=1 // pred_check
      _
    $region19: #{tpu_custom_call.1} parent=1 // pred_check_branch
      %70 = sbr.rel (0) target = $region21
    $region20: #{tpu_custom_call.1} parent=1 // pred_region
      _
    $region21: #{tpu_custom_call.1} parent=1 // pred_fallthru
      _
    // Predicated region
    $region22: #{tpu_custom_call.1} parent=1 // pred_check
      _
    $region23: #{tpu_custom_call.1} parent=1 // pred_check_branch
      %72 = sbr.rel (0) target = $region25
    $region24: #{tpu_custom_call.1} parent=1 // pred_region
      _
    $region25: #{tpu_custom_call.1} parent=1 // pred_fallthru
      _
    %73 = vsyncpa [#allocation6], 1

</llo_original>
